<compile_context>
chip_gen: v6e
topology: v6e:2x2x1
jax: 0.10.0
libtpu: 0.0.40
codegen_flags: <defaults>
</compile_context>

<pallas_src>
import jax
import jax.numpy as jnp
from jax.experimental import pallas as pl
from jax.experimental.pallas import tpu as pltpu


def generate_filter(start, end, size):
    # Same as the PyTorch helper: 1.0 inside the band [start, end], else 0.0.
    return [[0.0 if (i + j > end or i + j < start) else 1.0 for j in range(size)]
            for i in range(size)]


def _filter_kernel(x_ref, filt_ref, o_ref):
    # Elementwise hot path: upcast the x tile to f32 (VPU slot, no extra HBM
    # traffic), multiply by the resident f32 filter row (broadcast over
    # sublanes), cast only on the store.  One vmul + one vst per vreg.
    o_ref[...] = (x_ref[...].astype(jnp.float32) * filt_ref[...]).astype(o_ref.dtype)


def filter_forward(x, base, learnable=None, *, use_learnable=True, norm=False, ft_num=1.0):
    """x: (N, C, H, W); base/learnable: (H, W).  Returns x * filt (optionally / ft_num)."""
    N, C, H, W = x.shape
    hw = H * W

    # ---- build the grid-invariant filter once (tiny: H*W elems), in f32,
    #      with the norm scale folded in so the x-sized path is one multiply.
    if use_learnable:
        if learnable is None:
            raise ValueError("use_learnable=True requires a learnable filter")
        filt = base.astype(jnp.float32) + (
            2.0 * jax.nn.sigmoid(learnable.astype(jnp.float32)) - 1.0)
    else:
        filt = base.astype(jnp.float32)
    if norm:
        if float(ft_num) == 0.0:
            raise ValueError("norm=True requires a non-zero ft_num (empty band?)")
        filt = filt / jnp.float32(ft_num)

    # ---- lane-dense 2D layout
    if hw % 128 == 0:
        rows_total, lane = N * C, hw
        filt_row = filt.reshape(1, hw)
    else:
        # Fold C into the lane axis so the output last dim stays as dense as
        # possible (lane-dense out_spec is the biggest measured store lever).
        rows_total, lane = N, C * hw
        filt_row = jnp.tile(filt.reshape(1, hw), (1, C))
    x2d = x.reshape(rows_total, lane)

    # Match the reference promotion: x * f32-filter -> promoted dtype.
    out_dtype = jnp.promote_types(x.dtype, jnp.float32)

    # ---- tile sizing (dtype-aware sublane multiple, ~4 MiB tiles, VMEM guard)
    itemsize = jnp.dtype(x.dtype).itemsize
    out_itemsize = jnp.dtype(out_dtype).itemsize
    sub = max(8, 32 // itemsize)          # f32 -> 8, bf16 -> 16, int8/fp8 -> 32
    target_tile_bytes = 4 << 20

    min_rows = rows_total if rows_total <= sub else sub
    lane_block = lane
    if lane % 128 == 0 and min_rows * lane * itemsize > target_tile_bytes:
        # Even a minimal-row tile is too big: split the lane axis instead.
        lanes_by_budget = max(128, (target_tile_bytes // (min_rows * itemsize)) // 128 * 128)
        lane_block = min(lane, lanes_by_budget)

    row_bytes = lane_block * itemsize
    rows_by_budget = max(sub, (target_tile_bytes // max(row_bytes, 1)) // sub * sub)
    if rows_total <= sub:
        rows_block = rows_total          # full-dim block (allowed even if not 8-aligned)
    else:
        rows_block = max(sub, min(rows_by_budget, (rows_total // sub) * sub))
        if rows_block >= rows_total and lane_block == lane:
            # Give the 2-TC v7x >= 2 parallel grid steps instead of one big tile.
            half = -(-((rows_total + 1) // 2) // sub) * sub
            rows_block = max(sub, min(rows_block, half))

    grid_rows = pl.cdiv(rows_total, rows_block)
    grid_lanes = pl.cdiv(lane, lane_block)

    # Double-buffered input + output tiles (+ filter row) must fit scoped VMEM.
    tile_bytes = rows_block * lane_block * max(itemsize, out_itemsize)
    vmem_limit = min(60 << 20, max(32 << 20, 4 * tile_bytes + (2 << 20)))

    cost = pl.CostEstimate(
        flops=rows_total * lane,
        transcendentals=0,
        bytes_accessed=rows_total * lane * (itemsize + out_itemsize) + lane * 4,
    )

    out2d = pl.pallas_call(
        _filter_kernel,
        out_shape=jax.ShapeDtypeStruct((rows_total, lane), out_dtype),
        grid_spec=pltpu.PrefetchScalarGridSpec(
            num_scalar_prefetch=0,
            grid=(grid_rows, grid_lanes),
            in_specs=[
                pl.BlockSpec((rows_block, lane_block), lambda i, j: (i, j)),  # x tile
                pl.BlockSpec((1, lane_block), lambda i, j: (0, j)),           # f32 filter row
            ],
            out_specs=pl.BlockSpec((rows_block, lane_block), lambda i, j: (i, j)),
        ),
        compiler_params=pltpu.CompilerParams(
            dimension_semantics=("parallel", "parallel"),
            vmem_limit_bytes=vmem_limit,
        ),
        cost_estimate=cost,
    )(x2d, filt_row)

    return out2d.reshape(N, C, H, W)


def filter_reference(x, base, learnable, *, use_learnable=True, norm=False, ft_num=1.0):
    if use_learnable:
        filt = base + (2.0 * jax.nn.sigmoid(learnable) - 1.0)
    else:
        filt = base
    y = x * filt
    if norm:
        y = y / ft_num
    return y


if __name__ == "__main__":
    # Module config (matches Filter(size, band_start, band_end)).
    size = 16
    band_start, band_end = 0, size // 4  # e.g. the "low" band filter in F3Net

    key = jax.random.PRNGKey(0)
    k_x, k_learn, k_x2, k_x3 = jax.random.split(key, 4)

    base = jnp.asarray(generate_filter(band_start, band_end, size), dtype=jnp.float32)
    learnable = 0.1 * jax.random.normal(k_learn, (size, size), dtype=jnp.float32)
    ft_num = float(jnp.sum(base))  # only used if norm=True

    # Example input: NCHW, small shapes.
    N, C = 2, 4
    x = jax.random.normal(k_x, (N, C, size, size), dtype=jnp.float32)

    # Case 1: use_learnable=True, norm=False (default F3Net Filter config).
    y = jax.block_until_ready(filter_forward(x, base, learnable, use_learnable=True, norm=False))
    y_ref = filter_reference(x, base, learnable, use_learnable=True, norm=False)
    assert y.shape == (N, C, size, size)
    assert jnp.allclose(y, y_ref, atol=1e-5, rtol=1e-5), "mismatch vs reference (norm=False)"

    # Case 2: norm=True path (scale folded into the filter inside the wrapper).
    y2 = jax.block_until_ready(
        filter_forward(x, base, learnable, use_learnable=True, norm=True, ft_num=ft_num))
    y2_ref = filter_reference(x, base, learnable, use_learnable=True, norm=True, ft_num=ft_num)
    assert jnp.allclose(y2, y2_ref, atol=1e-5, rtol=1e-5), "mismatch vs reference (norm=True)"

    # Case 3: use_learnable=False (learnable never enters the pallas_call).
    y3 = jax.block_until_ready(filter_forward(x, base, use_learnable=False, norm=False))
    y3_ref = filter_reference(x, base, learnable, use_learnable=False, norm=False)
    assert jnp.allclose(y3, y3_ref, atol=1e-5, rtol=1e-5), "mismatch vs reference (no learnable)"

    # Case 4: rows not a multiple of 8 -> exercises the partial last block
    # (no jnp.pad / output slice; OOB writes of the partial block are dropped).
    x4 = jax.random.normal(k_x2, (3, 3, size, size), dtype=jnp.float32)
    y4 = jax.block_until_ready(filter_forward(x4, base, learnable, use_learnable=True, norm=False))
    y4_ref = filter_reference(x4, base, learnable, use_learnable=True, norm=False)
    assert jnp.allclose(y4, y4_ref, atol=1e-5, rtol=1e-5), "mismatch vs reference (partial block)"

    # Case 5: bf16 input -> filter stays f32, multiply promoted to f32 in-kernel.
    x5 = jax.random.normal(k_x3, (2, 8, size, size), dtype=jnp.bfloat16)
    y5 = jax.block_until_ready(filter_forward(x5, base, learnable, use_learnable=True, norm=False))
    y5_ref = filter_reference(x5, base, learnable, use_learnable=True, norm=False)
    assert y5.dtype == jnp.float32
    assert jnp.allclose(y5, y5_ref, atol=1e-6, rtol=1e-6), "mismatch vs reference (bf16 input)"

    print("KERNEL_OK")
</pallas_src>

<mosaic_0001>
module attributes {stable_mosaic.version = 11 : i64} {
  func.func @_filter_kernel(%arg0: i32, %arg1: i32, %arg2: memref<8x256xf32, #tpu.memory_space<vmem>>, %arg3: memref<1x256xf32, #tpu.memory_space<vmem>>, %arg4: memref<8x256xf32, #tpu.memory_space<vmem>>) attributes {dimension_semantics = [#tpu.dimension_semantics<parallel>, #tpu.dimension_semantics<parallel>], iteration_bounds = array<i64: 1, 1>, scalar_prefetch = 0 : i64, scratch_operands = 0 : i64, tpu.core_type = #tpu.core_type<tc>, window_params = [{transform_indices = @transform_0, window_bounds = array<i64: 8, 256>}, {transform_indices = @transform_1, window_bounds = array<i64: 1, 256>}, {transform_indices = @transform_2, window_bounds = array<i64: 8, 256>}]} {
    %c0 = arith.constant 0 : index
    %c0_0 = arith.constant 0 : index
    %0 = vector.load %arg2[%c0, %c0_0] : memref<8x256xf32, #tpu.memory_space<vmem>>, vector<8x256xf32>
    %c0_1 = arith.constant 0 : index
    %c0_2 = arith.constant 0 : index
    %1 = vector.load %arg3[%c0_1, %c0_2] : memref<1x256xf32, #tpu.memory_space<vmem>>, vector<1x256xf32>
    %2 = vector.broadcast %1 : vector<1x256xf32> to vector<8x256xf32>
    %3 = arith.mulf %0, %2 : vector<8x256xf32>
    %c0_3 = arith.constant 0 : index
    %c0_4 = arith.constant 0 : index
    %4 = vector.load %arg4[%c0_3, %c0_4] : memref<8x256xf32, #tpu.memory_space<vmem>>, vector<8x256xf32>
    tpu.vector_store %arg4[%c0_3, %c0_4], %3 {strides = array<i32>} : memref<8x256xf32, #tpu.memory_space<vmem>>, vector<8x256xf32>,
    return
  }
  func.func @transform_0(%arg0: i32, %arg1: i32) -> (i32, i32) {
    %c0_i32 = arith.constant 0 : i32
    return %arg0, %arg1 : i32, i32
  }
  func.func @transform_1(%arg0: i32, %arg1: i32) -> (i32, i32) {
    %c0_i32 = arith.constant 0 : i32
    %c0_i32_0 = arith.constant 0 : i32
    return %c0_i32, %arg1 : i32, i32
  }
  func.func @transform_2(%arg0: i32, %arg1: i32) -> (i32, i32) {
    %c0_i32 = arith.constant 0 : i32
    return %arg0, %arg1 : i32, i32
  }
}

</mosaic_0001>

<llo_original>
// kernel: tpu_custom_call.1
$region0: #{tpu_custom_call.1}
  #allocation0 [shape = 'u32[]', space=smem, size = 0x4, offset = 0x4, fixed_abs, tag = 'smem constant byte address 0x4 - core index']
  #allocation1 [shape = 'u32[144,128]{1,0:T(1,128)}', space=vmem, size = 0x12000, scoped, tag = 'internal scratch']
  %s0 = inlined_call_operand.hbm [shape: f32[8,256], index: 0, kind: input, shape index: {}]
  %s1 = inlined_call_operand.hbm [shape: f32[1,256], index: 1, kind: input, shape index: {}]
  %s2 = inlined_call_operand.hbm [shape: f32[8,256], index: 2, kind: output, shape index: {}]
  %s3 = sld [smem:[#allocation0]]
  $region26: #{tpu_custom_call.1} parent=0
    _
  %s5 = ssub.s32 1, %s3
  %s6 = scalar_select 0, %s5, %s3
  $region1: #{tpu_custom_call.1} parent=0
    #allocation2 [shape = 'u8[8192]{0}', space=vmem, size = 0x2000, scoped, tag = 'input window, operand 0, single buffered']
    #allocation3 [shape = 's32[1]{0}', space=sflag, size = 0x4, scoped, tag = 'scoped memory for tpu_custom_call.1']
    #allocation4 [shape = 's32[1]{0}', space=sflag, size = 0x4, scoped, tag = 'scoped memory for tpu_custom_call.1']
    #allocation5 [shape = 'u8[1024]{0}', space=vmem, size = 0x400, scoped, tag = 'input window, operand 1, single buffered']
    #allocation6 [shape = 's32[1]{0}', space=sflag, size = 0x4, scoped, tag = 'scoped memory for tpu_custom_call.1']
    #allocation7 [shape = 'u8[8192]{0}', space=vmem, size = 0x2000, scoped, tag = 'output window, operand 0, single buffered']
    %7 = vsyncpa [#allocation3], 0
    %8 = vsyncpa [#allocation6], 0
    %9 = vsyncpa [#allocation4], 0
    // Predicated region
    $region2: #{tpu_custom_call.1} parent=1 // pred_check
      _
    $region3: #{tpu_custom_call.1} parent=1 // pred_check_branch
      %11 = sbr.rel (0) target = $region5
    $region4: #{tpu_custom_call.1} parent=1 // pred_region
      %s13 = ssub.s32 256, 256
      %14 = vsyncadd [#allocation3], %s13
      %s16 = sshll.u32 [#allocation2], 4
      %s17 = int_to_ptr.vmem [resolvable:$true] %s16
      %19 = dma.hbm_to_vmem [thread:$0]  %s0, 256, %s17, [#allocation3]
    $region5: #{tpu_custom_call.1} parent=1 // pred_fallthru
      _
    // Predicated region
    $region6: #{tpu_custom_call.1} parent=1 // pred_check
      _
    $region7: #{tpu_custom_call.1} parent=1 // pred_check_branch
      %21 = sbr.rel (0) target = $region9
    $region8: #{tpu_custom_call.1} parent=1 // pred_region
      %s23 = ssub.s32 32, 32
      %24 = vsyncadd [#allocation6], %s23
      %s26 = sshll.u32 [#allocation5], 4
      %s27 = int_to_ptr.vmem [resolvable:$true] %s26
      %29 = dma.hbm_to_vmem [thread:$0]  %s1, 32, %s27, [#allocation6]
    $region9: #{tpu_custom_call.1} parent=1 // pred_fallthru
      _
    // Predicated region
    $region10: #{tpu_custom_call.1} parent=1 // pred_check
      _
    $region11: #{tpu_custom_call.1} parent=1 // pred_check_branch
      %31 = sbr.rel (0) target = $region13
    $region12: #{tpu_custom_call.1} parent=1 // pred_region
      %32 = dma.done [#allocation3], 256
    $region13: #{tpu_custom_call.1} parent=1 // pred_fallthru
      _
    // Predicated region
    $region14: #{tpu_custom_call.1} parent=1 // pred_check
      _
    $region15: #{tpu_custom_call.1} parent=1 // pred_check_branch
      %34 = sbr.rel (0) target = $region17
    $region16: #{tpu_custom_call.1} parent=1 // pred_region
      %35 = dma.done [#allocation6], 32
    $region17: #{tpu_custom_call.1} parent=1 // pred_fallthru
      _
    %v36 = vld [vmem:[#allocation2] sm:$0xff]
    %v37 = vld [vmem:[#allocation2 + $0x8] sm:$0xff]
    %v38 = vld [vmem:[#allocation5] sm:$0x3]
    %v40 = vlaneseq
    %v41 = vshrl.u32 %v40, 7
    %v42 = vsub.s32 0, %v41
    %v43 = vrot.slane %v38, %v42
    %v44 = vlaneseq
    %v45 = vshrl.u32 %v44, 7
    %v46 = vsub.s32 1, %v45
    %v47 = vrot.slane %v38, %v46
    %v50 = vmul.f32 %v36, %v43
    %v51 = vmul.f32 %v37, %v47
    %52 = vst [vmem:[#allocation7] sm:$0xff] %v50
    %53 = vst [vmem:[#allocation7 + $0x8] sm:$0xff] %v51
    // Predicated region
    $region18: #{tpu_custom_call.1} parent=1 // pred_check
      _
    $region19: #{tpu_custom_call.1} parent=1 // pred_check_branch
      %55 = sbr.rel (0) target = $region21
    $region20: #{tpu_custom_call.1} parent=1 // pred_region
      %s57 = ssub.s32 256, 256
      %58 = vsyncadd [#allocation4], %s57
      %s60 = sshll.u32 [#allocation7], 4
      %s61 = int_to_ptr.vmem [resolvable:$true] %s60
      %63 = dma.vmem_to_hbm [thread:$0]  %s61, 256, %s2, [#allocation4]
    $region21: #{tpu_custom_call.1} parent=1 // pred_fallthru
      _
    // Predicated region
    $region22: #{tpu_custom_call.1} parent=1 // pred_check
      _
    $region23: #{tpu_custom_call.1} parent=1 // pred_check_branch
      %65 = sbr.rel (0) target = $region25
    $region24: #{tpu_custom_call.1} parent=1 // pred_region
      %66 = dma.done [#allocation4], 256
    $region25: #{tpu_custom_call.1} parent=1 // pred_fallthru
      _
    %67 = vsyncpa [#allocation3], 1
    %68 = vsyncpa [#allocation6], 1
    %69 = vsyncpa [#allocation4], 1

</llo_original>
